<compile_context>
chip_gen: v6e
topology: v6e:2x2x1
jax: 0.10.0
libtpu: 0.0.40
codegen_flags: <defaults>
</compile_context>

<pallas_src>
import functools

import jax
import jax.numpy as jnp
from jax.experimental import pallas as pl
from jax.experimental.pallas import tpu as pltpu

# Real (PyTorch) dims
D_IN = 1
D_HID = 10
D_OUT = 1

LANES = 128          # batch elements per lane row
SUBLANES = 8         # sublane granularity for f32 tiles
MAX_TILE_ROWS = 512  # 512*128*4B = 256 KiB/block; ~1 MiB double-buffered in+out


def _mlp_kernel(w1_ref, b1_ref, w2_ref, b2_ref, x_ref, o_ref):
    """Batch-on-lanes MLP: pure VPU broadcast-FMA + relu, no MXU."""
    x = x_ref[...]                                  # (tile_rows, 128)
    acc = jnp.zeros_like(x) + b2_ref[0]             # broadcast output bias
    # 10 hidden units, fully unrolled: ~3 VPU ops per unit per element.
    for j in range(D_HID):
        h = jnp.maximum(x * w1_ref[j] + b1_ref[j], 0.0)
        acc = acc + h * w2_ref[j]
    o_ref[...] = acc


def init_params(key):
    """Deterministic nn.Linear-style init (uniform +-1/sqrt(fan_in))."""
    k1, k2, k3, k4 = jax.random.split(key, 4)
    bound1 = 1.0 / (D_IN ** 0.5)
    bound2 = 1.0 / (D_HID ** 0.5)
    w1 = jax.random.uniform(k1, (D_IN, D_HID), jnp.float32, -bound1, bound1)
    b1 = jax.random.uniform(k2, (D_HID,), jnp.float32, -bound1, bound1)
    w2 = jax.random.uniform(k3, (D_HID, D_OUT), jnp.float32, -bound2, bound2)
    b2 = jax.random.uniform(k4, (D_OUT,), jnp.float32, -bound2, bound2)
    return w1, b1, w2, b2


@jax.jit
def basic_nn_forward(x, w1, b1, w2, b2):
    """x: (N, 1) float32 -> (N, 1) float32, matching BasicNN.forward."""
    n = x.shape[0]

    # Batch-on-lanes layout: dense (rows, 128) slab, zero-padded at the tail.
    rows = -(-n // LANES)                       # ceil(N / 128)
    rows = -(-rows // SUBLANES) * SUBLANES      # round up to sublane multiple
    tile_rows = min(MAX_TILE_ROWS, rows)
    grid_n = -(-rows // tile_rows)
    rows_pad = grid_n * tile_rows
    n_pad = rows_pad * LANES

    x_flat = x.reshape(-1)
    x_p = jnp.pad(x_flat, (0, n_pad - n)).reshape(rows_pad, LANES)

    # Flat parameter vectors for SMEM (31 scalars total).
    w1_flat = w1.reshape(D_HID)
    b1_flat = b1.reshape(D_HID)
    w2_flat = w2.reshape(D_HID)
    b2_flat = b2.reshape(D_OUT)

    out_p = pl.pallas_call(
        _mlp_kernel,
        out_shape=jax.ShapeDtypeStruct((rows_pad, LANES), jnp.float32),
        grid=(grid_n,),
        in_specs=[
            pl.BlockSpec(memory_space=pltpu.MemorySpace.SMEM),  # w1 (10,)
            pl.BlockSpec(memory_space=pltpu.MemorySpace.SMEM),  # b1 (10,)
            pl.BlockSpec(memory_space=pltpu.MemorySpace.SMEM),  # w2 (10,)
            pl.BlockSpec(memory_space=pltpu.MemorySpace.SMEM),  # b2 (1,)
            pl.BlockSpec((tile_rows, LANES), lambda i: (i, 0)),  # x tile
        ],
        out_specs=pl.BlockSpec((tile_rows, LANES), lambda i: (i, 0)),
        compiler_params=pltpu.CompilerParams(
            dimension_semantics=("parallel",),
        ),
    )(w1_flat, b1_flat, w2_flat, b2_flat, x_p)

    return out_p.reshape(-1)[:n].reshape(n, D_OUT)


def _reference(x, w1, b1, w2, b2):
    return jnp.maximum(x @ w1 + b1, 0.0) @ w2 + b2


if __name__ == "__main__":
    key = jax.random.PRNGKey(0)
    k_params, k_x1, k_x2 = jax.random.split(key, 3)

    w1, b1, w2, b2 = init_params(k_params)

    ok = True

    # Small batch of scalar inputs, matching BasicNN's (N, 1) input shape.
    x_small = jax.random.normal(k_x1, (8, 1), jnp.float32)
    y_small = jax.block_until_ready(basic_nn_forward(x_small, w1, b1, w2, b2))
    ref_small = _reference(x_small, w1, b1, w2, b2)
    ok &= y_small.shape == (8, 1)
    ok &= bool(jnp.allclose(y_small, ref_small, atol=1e-5, rtol=1e-5))

    # Ragged batch that exercises lane padding / tail masking in the wrapper.
    x_odd = jax.random.normal(k_x2, (300, 1), jnp.float32)
    y_odd = jax.block_until_ready(basic_nn_forward(x_odd, w1, b1, w2, b2))
    ref_odd = _reference(x_odd, w1, b1, w2, b2)
    ok &= y_odd.shape == (300, 1)
    ok &= bool(jnp.allclose(y_odd, ref_odd, atol=1e-5, rtol=1e-5))

    assert ok
    print("KERNEL_OK")
</pallas_src>

<mosaic_0001>
module attributes {stable_mosaic.version = 11 : i64} {
  func.func @_mlp_kernel(%arg0: i32, %arg1: memref<10xf32, #tpu.memory_space<smem>>, %arg2: memref<10xf32, #tpu.memory_space<smem>>, %arg3: memref<10xf32, #tpu.memory_space<smem>>, %arg4: memref<1xf32, #tpu.memory_space<smem>>, %arg5: memref<8x128xf32, #tpu.memory_space<vmem>>, %arg6: memref<8x128xf32, #tpu.memory_space<vmem>>) attributes {dimension_semantics = [#tpu.dimension_semantics<parallel>], iteration_bounds = array<i64: 1>, scalar_prefetch = 0 : i64, scratch_operands = 0 : i64, tpu.core_type = #tpu.core_type<tc>, window_params = [{transform_indices = @transform_0, window_bounds = array<i64: 10>}, {transform_indices = @transform_1, window_bounds = array<i64: 10>}, {transform_indices = @transform_2, window_bounds = array<i64: 10>}, {transform_indices = @transform_3, window_bounds = array<i64: 1>}, {transform_indices = @transform_4, window_bounds = array<i64: 8, 128>}, {transform_indices = @transform_5, window_bounds = array<i64: 8, 128>}]} {
    %c0 = arith.constant 0 : index
    %c0_0 = arith.constant 0 : index
    %0 = vector.load %arg5[%c0, %c0_0] : memref<8x128xf32, #tpu.memory_space<vmem>>, vector<8x128xf32>
    %cst = arith.constant 0.000000e+00 : f32
    %1 = vector.broadcast %cst : f32 to vector<8x128xf32>
    %c0_1 = arith.constant 0 : index
    %2 = memref.load %arg4[%c0_1] : memref<1xf32, #tpu.memory_space<smem>>
    %3 = vector.broadcast %2 : f32 to vector<8x128xf32>
    %4 = arith.addf %1, %3 : vector<8x128xf32>
    %c0_2 = arith.constant 0 : index
    %5 = memref.load %arg1[%c0_2] : memref<10xf32, #tpu.memory_space<smem>>
    %6 = vector.broadcast %5 : f32 to vector<8x128xf32>
    %7 = arith.mulf %0, %6 : vector<8x128xf32>
    %c0_3 = arith.constant 0 : index
    %8 = memref.load %arg2[%c0_3] : memref<10xf32, #tpu.memory_space<smem>>
    %9 = vector.broadcast %8 : f32 to vector<8x128xf32>
    %10 = arith.addf %7, %9 : vector<8x128xf32>
    %cst_4 = arith.constant 0.000000e+00 : f32
    %11 = vector.broadcast %cst_4 : f32 to vector<8x128xf32>
    %12 = arith.maximumf %10, %11 : vector<8x128xf32>
    %c0_5 = arith.constant 0 : index
    %13 = memref.load %arg3[%c0_5] : memref<10xf32, #tpu.memory_space<smem>>
    %14 = vector.broadcast %13 : f32 to vector<8x128xf32>
    %15 = arith.mulf %12, %14 : vector<8x128xf32>
    %16 = arith.addf %4, %15 : vector<8x128xf32>
    %c1 = arith.constant 1 : index
    %17 = memref.load %arg1[%c1] : memref<10xf32, #tpu.memory_space<smem>>
    %18 = vector.broadcast %17 : f32 to vector<8x128xf32>
    %19 = arith.mulf %0, %18 : vector<8x128xf32>
    %c1_6 = arith.constant 1 : index
    %20 = memref.load %arg2[%c1_6] : memref<10xf32, #tpu.memory_space<smem>>
    %21 = vector.broadcast %20 : f32 to vector<8x128xf32>
    %22 = arith.addf %19, %21 : vector<8x128xf32>
    %cst_7 = arith.constant 0.000000e+00 : f32
    %23 = vector.broadcast %cst_7 : f32 to vector<8x128xf32>
    %24 = arith.maximumf %22, %23 : vector<8x128xf32>
    %c1_8 = arith.constant 1 : index
    %25 = memref.load %arg3[%c1_8] : memref<10xf32, #tpu.memory_space<smem>>
    %26 = vector.broadcast %25 : f32 to vector<8x128xf32>
    %27 = arith.mulf %24, %26 : vector<8x128xf32>
    %28 = arith.addf %16, %27 : vector<8x128xf32>
    %c2 = arith.constant 2 : index
    %29 = memref.load %arg1[%c2] : memref<10xf32, #tpu.memory_space<smem>>
    %30 = vector.broadcast %29 : f32 to vector<8x128xf32>
    %31 = arith.mulf %0, %30 : vector<8x128xf32>
    %c2_9 = arith.constant 2 : index
    %32 = memref.load %arg2[%c2_9] : memref<10xf32, #tpu.memory_space<smem>>
    %33 = vector.broadcast %32 : f32 to vector<8x128xf32>
    %34 = arith.addf %31, %33 : vector<8x128xf32>
    %cst_10 = arith.constant 0.000000e+00 : f32
    %35 = vector.broadcast %cst_10 : f32 to vector<8x128xf32>
    %36 = arith.maximumf %34, %35 : vector<8x128xf32>
    %c2_11 = arith.constant 2 : index
    %37 = memref.load %arg3[%c2_11] : memref<10xf32, #tpu.memory_space<smem>>
    %38 = vector.broadcast %37 : f32 to vector<8x128xf32>
    %39 = arith.mulf %36, %38 : vector<8x128xf32>
    %40 = arith.addf %28, %39 : vector<8x128xf32>
    %c3 = arith.constant 3 : index
    %41 = memref.load %arg1[%c3] : memref<10xf32, #tpu.memory_space<smem>>
    %42 = vector.broadcast %41 : f32 to vector<8x128xf32>
    %43 = arith.mulf %0, %42 : vector<8x128xf32>
    %c3_12 = arith.constant 3 : index
    %44 = memref.load %arg2[%c3_12] : memref<10xf32, #tpu.memory_space<smem>>
    %45 = vector.broadcast %44 : f32 to vector<8x128xf32>
    %46 = arith.addf %43, %45 : vector<8x128xf32>
    %cst_13 = arith.constant 0.000000e+00 : f32
    %47 = vector.broadcast %cst_13 : f32 to vector<8x128xf32>
    %48 = arith.maximumf %46, %47 : vector<8x128xf32>
    %c3_14 = arith.constant 3 : index
    %49 = memref.load %arg3[%c3_14] : memref<10xf32, #tpu.memory_space<smem>>
    %50 = vector.broadcast %49 : f32 to vector<8x128xf32>
    %51 = arith.mulf %48, %50 : vector<8x128xf32>
    %52 = arith.addf %40, %51 : vector<8x128xf32>
    %c4 = arith.constant 4 : index
    %53 = memref.load %arg1[%c4] : memref<10xf32, #tpu.memory_space<smem>>
    %54 = vector.broadcast %53 : f32 to vector<8x128xf32>
    %55 = arith.mulf %0, %54 : vector<8x128xf32>
    %c4_15 = arith.constant 4 : index
    %56 = memref.load %arg2[%c4_15] : memref<10xf32, #tpu.memory_space<smem>>
    %57 = vector.broadcast %56 : f32 to vector<8x128xf32>
    %58 = arith.addf %55, %57 : vector<8x128xf32>
    %cst_16 = arith.constant 0.000000e+00 : f32
    %59 = vector.broadcast %cst_16 : f32 to vector<8x128xf32>
    %60 = arith.maximumf %58, %59 : vector<8x128xf32>
    %c4_17 = arith.constant 4 : index
    %61 = memref.load %arg3[%c4_17] : memref<10xf32, #tpu.memory_space<smem>>
    %62 = vector.broadcast %61 : f32 to vector<8x128xf32>
    %63 = arith.mulf %60, %62 : vector<8x128xf32>
    %64 = arith.addf %52, %63 : vector<8x128xf32>
    %c5 = arith.constant 5 : index
    %65 = memref.load %arg1[%c5] : memref<10xf32, #tpu.memory_space<smem>>
    %66 = vector.broadcast %65 : f32 to vector<8x128xf32>
    %67 = arith.mulf %0, %66 : vector<8x128xf32>
    %c5_18 = arith.constant 5 : index
    %68 = memref.load %arg2[%c5_18] : memref<10xf32, #tpu.memory_space<smem>>
    %69 = vector.broadcast %68 : f32 to vector<8x128xf32>
    %70 = arith.addf %67, %69 : vector<8x128xf32>
    %cst_19 = arith.constant 0.000000e+00 : f32
    %71 = vector.broadcast %cst_19 : f32 to vector<8x128xf32>
    %72 = arith.maximumf %70, %71 : vector<8x128xf32>
    %c5_20 = arith.constant 5 : index
    %73 = memref.load %arg3[%c5_20] : memref<10xf32, #tpu.memory_space<smem>>
    %74 = vector.broadcast %73 : f32 to vector<8x128xf32>
    %75 = arith.mulf %72, %74 : vector<8x128xf32>
    %76 = arith.addf %64, %75 : vector<8x128xf32>
    %c6 = arith.constant 6 : index
    %77 = memref.load %arg1[%c6] : memref<10xf32, #tpu.memory_space<smem>>
    %78 = vector.broadcast %77 : f32 to vector<8x128xf32>
    %79 = arith.mulf %0, %78 : vector<8x128xf32>
    %c6_21 = arith.constant 6 : index
    %80 = memref.load %arg2[%c6_21] : memref<10xf32, #tpu.memory_space<smem>>
    %81 = vector.broadcast %80 : f32 to vector<8x128xf32>
    %82 = arith.addf %79, %81 : vector<8x128xf32>
    %cst_22 = arith.constant 0.000000e+00 : f32
    %83 = vector.broadcast %cst_22 : f32 to vector<8x128xf32>
    %84 = arith.maximumf %82, %83 : vector<8x128xf32>
    %c6_23 = arith.constant 6 : index
    %85 = memref.load %arg3[%c6_23] : memref<10xf32, #tpu.memory_space<smem>>
    %86 = vector.broadcast %85 : f32 to vector<8x128xf32>
    %87 = arith.mulf %84, %86 : vector<8x128xf32>
    %88 = arith.addf %76, %87 : vector<8x128xf32>
    %c7 = arith.constant 7 : index
    %89 = memref.load %arg1[%c7] : memref<10xf32, #tpu.memory_space<smem>>
    %90 = vector.broadcast %89 : f32 to vector<8x128xf32>
    %91 = arith.mulf %0, %90 : vector<8x128xf32>
    %c7_24 = arith.constant 7 : index
    %92 = memref.load %arg2[%c7_24] : memref<10xf32, #tpu.memory_space<smem>>
    %93 = vector.broadcast %92 : f32 to vector<8x128xf32>
    %94 = arith.addf %91, %93 : vector<8x128xf32>
    %cst_25 = arith.constant 0.000000e+00 : f32
    %95 = vector.broadcast %cst_25 : f32 to vector<8x128xf32>
    %96 = arith.maximumf %94, %95 : vector<8x128xf32>
    %c7_26 = arith.constant 7 : index
    %97 = memref.load %arg3[%c7_26] : memref<10xf32, #tpu.memory_space<smem>>
    %98 = vector.broadcast %97 : f32 to vector<8x128xf32>
    %99 = arith.mulf %96, %98 : vector<8x128xf32>
    %100 = arith.addf %88, %99 : vector<8x128xf32>
    %c8 = arith.constant 8 : index
    %101 = memref.load %arg1[%c8] : memref<10xf32, #tpu.memory_space<smem>>
    %102 = vector.broadcast %101 : f32 to vector<8x128xf32>
    %103 = arith.mulf %0, %102 : vector<8x128xf32>
    %c8_27 = arith.constant 8 : index
    %104 = memref.load %arg2[%c8_27] : memref<10xf32, #tpu.memory_space<smem>>
    %105 = vector.broadcast %104 : f32 to vector<8x128xf32>
    %106 = arith.addf %103, %105 : vector<8x128xf32>
    %cst_28 = arith.constant 0.000000e+00 : f32
    %107 = vector.broadcast %cst_28 : f32 to vector<8x128xf32>
    %108 = arith.maximumf %106, %107 : vector<8x128xf32>
    %c8_29 = arith.constant 8 : index
    %109 = memref.load %arg3[%c8_29] : memref<10xf32, #tpu.memory_space<smem>>
    %110 = vector.broadcast %109 : f32 to vector<8x128xf32>
    %111 = arith.mulf %108, %110 : vector<8x128xf32>
    %112 = arith.addf %100, %111 : vector<8x128xf32>
    %c9 = arith.constant 9 : index
    %113 = memref.load %arg1[%c9] : memref<10xf32, #tpu.memory_space<smem>>
    %114 = vector.broadcast %113 : f32 to vector<8x128xf32>
    %115 = arith.mulf %0, %114 : vector<8x128xf32>
    %c9_30 = arith.constant 9 : index
    %116 = memref.load %arg2[%c9_30] : memref<10xf32, #tpu.memory_space<smem>>
    %117 = vector.broadcast %116 : f32 to vector<8x128xf32>
    %118 = arith.addf %115, %117 : vector<8x128xf32>
    %cst_31 = arith.constant 0.000000e+00 : f32
    %119 = vector.broadcast %cst_31 : f32 to vector<8x128xf32>
    %120 = arith.maximumf %118, %119 : vector<8x128xf32>
    %c9_32 = arith.constant 9 : index
    %121 = memref.load %arg3[%c9_32] : memref<10xf32, #tpu.memory_space<smem>>
    %122 = vector.broadcast %121 : f32 to vector<8x128xf32>
    %123 = arith.mulf %120, %122 : vector<8x128xf32>
    %124 = arith.addf %112, %123 : vector<8x128xf32>
    %c0_33 = arith.constant 0 : index
    %c0_34 = arith.constant 0 : index
    %125 = vector.load %arg6[%c0_33, %c0_34] : memref<8x128xf32, #tpu.memory_space<vmem>>, vector<8x128xf32>
    tpu.vector_store %arg6[%c0_33, %c0_34], %124 {strides = array<i32>} : memref<8x128xf32, #tpu.memory_space<vmem>>, vector<8x128xf32>,
    return
  }
  func.func @transform_0(%arg0: i32) -> i32 {
    %c0_i32 = arith.constant 0 : i32
    %c0_i32_0 = arith.constant 0 : i32
    return %c0_i32 : i32
  }
  func.func @transform_1(%arg0: i32) -> i32 {
    %c0_i32 = arith.constant 0 : i32
    %c0_i32_0 = arith.constant 0 : i32
    return %c0_i32 : i32
  }
  func.func @transform_2(%arg0: i32) -> i32 {
    %c0_i32 = arith.constant 0 : i32
    %c0_i32_0 = arith.constant 0 : i32
    return %c0_i32 : i32
  }
  func.func @transform_3(%arg0: i32) -> i32 {
    %c0_i32 = arith.constant 0 : i32
    %c0_i32_0 = arith.constant 0 : i32
    return %c0_i32 : i32
  }
  func.func @transform_4(%arg0: i32) -> (i32, i32) {
    %c0_i32 = arith.constant 0 : i32
    %c0_i32_0 = arith.constant 0 : i32
    return %arg0, %c0_i32 : i32, i32
  }
  func.func @transform_5(%arg0: i32) -> (i32, i32) {
    %c0_i32 = arith.constant 0 : i32
    %c0_i32_0 = arith.constant 0 : i32
    return %arg0, %c0_i32 : i32, i32
  }
}

</mosaic_0001>

<llo_original>
// kernel: basic_nn_forward.1
$region0: #{basic_nn_forward.1}
  #allocation0 [shape = 'u32[]', space=smem, size = 0x4, offset = 0x4, fixed_abs, tag = 'smem constant byte address 0x4 - core index']
  #allocation1 [shape = 'u32[144,128]{1,0:T(1,128)}', space=vmem, size = 0x12000, scoped, tag = 'internal scratch']
  #allocation2 [shape = 'f32[1]{0:T(128)S(6)}', space=smem, size = 0x200, scoped, tag = 'scoped memory for basic_nn_forward.1']
  %s0 = inlined_call_operand.vmem [shape: f32[10], index: 0, kind: input, shape index: {}]
  %s1 = inlined_call_operand.vmem [shape: f32[10], index: 1, kind: input, shape index: {}]
  %s2 = inlined_call_operand.vmem [shape: f32[10], index: 2, kind: input, shape index: {}]
  %s3 = inlined_call_operand.<no memory space> [shape: f32[1], index: 3, kind: input, shape index: {}]
  %s4 = inlined_call_operand.vmem [shape: f32[8,128], index: 4, kind: input, shape index: {}]
  %s5 = inlined_call_operand.vmem [shape: f32[8,128], index: 5, kind: output, shape index: {}]
  %s6 = sld [smem:[#allocation0]]
  $region42: #{basic_nn_forward.1} parent=0
    _
  %s8 = ssub.s32 1, %s6
  %s9 = scalar_select 0, %s8, %s6
  %10 = sst [smem:[#allocation2]] %s3
  $region1: #{basic_nn_forward.1} parent=0
    #allocation3 [shape = 'u8[512]{0}', space=smem, size = 0x200, scoped, tag = 'input window, operand 0, single buffered']
    #allocation4 [shape = 's32[1]{0}', space=sflag, size = 0x4, scoped, tag = 'scoped memory for basic_nn_forward.1']
    #allocation5 [shape = 'u8[512]{0}', space=smem, size = 0x200, scoped, tag = 'input window, operand 1, single buffered']
    #allocation6 [shape = 's32[1]{0}', space=sflag, size = 0x4, scoped, tag = 'scoped memory for basic_nn_forward.1']
    #allocation7 [shape = 'u8[512]{0}', space=smem, size = 0x200, scoped, tag = 'input window, operand 2, single buffered']
    %11 = vsyncpa [#allocation4], 0
    %12 = vsyncpa [#allocation6], 0
    // Predicated region
    $region2: #{basic_nn_forward.1} parent=1 // pred_check
      _
    $region3: #{basic_nn_forward.1} parent=1 // pred_check_branch
      %14 = sbr.rel (0) target = $region5
    $region4: #{basic_nn_forward.1} parent=1 // pred_region
      %s16 = ssub.s32 16, 16
      %17 = vsyncadd [#allocation4], %s16
      %s19 = sshll.u32 %s0, 4
      %s20 = int_to_ptr.vmem [resolvable:$true] %s19
      %22 = dma.vmem_to_smem %s20, 16, [#allocation3], [#allocation4]
    $region5: #{basic_nn_forward.1} parent=1 // pred_fallthru
      _
    // Predicated region
    $region6: #{basic_nn_forward.1} parent=1 // pred_check
      _
    $region7: #{basic_nn_forward.1} parent=1 // pred_check_branch
      %24 = sbr.rel (0) target = $region9
    $region8: #{basic_nn_forward.1} parent=1 // pred_region
      %s26 = ssub.s32 16, 16
      %27 = vsyncadd [#allocation6], %s26
      %s29 = sshll.u32 %s1, 4
      %s30 = int_to_ptr.vmem [resolvable:$true] %s29
      %32 = dma.vmem_to_smem %s30, 16, [#allocation5], [#allocation6]
    $region9: #{basic_nn_forward.1} parent=1 // pred_fallthru
      _
    // Predicated region
    $region10: #{basic_nn_forward.1} parent=1 // pred_check
      _
    $region11: #{basic_nn_forward.1} parent=1 // pred_check_branch
      %34 = sbr.rel (0) target = $region13
    $region12: #{basic_nn_forward.1} parent=1 // pred_region
      %s36 = ssub.s32 16, 16
      %37 = vsyncadd [#allocation6], %s36
      %s39 = sshll.u32 %s2, 4
      %s40 = int_to_ptr.vmem [resolvable:$true] %s39
      %42 = dma.vmem_to_smem %s40, 16, [#allocation7], [#allocation6]
    $region13: #{basic_nn_forward.1} parent=1 // pred_fallthru
      _
    // Predicated region
    $region14: #{basic_nn_forward.1} parent=1 // pred_check
      _
    $region15: #{basic_nn_forward.1} parent=1 // pred_check_branch
      %44 = sbr.rel (0) target = $region17
    $region16: #{basic_nn_forward.1} parent=1 // pred_region
      _
    $region17: #{basic_nn_forward.1} parent=1 // pred_fallthru
      _
    // Predicated region
    $region18: #{basic_nn_forward.1} parent=1 // pred_check
      _
    $region19: #{basic_nn_forward.1} parent=1 // pred_check_branch
      %46 = sbr.rel (0) target = $region21
    $region20: #{basic_nn_forward.1} parent=1 // pred_region
      _
    $region21: #{basic_nn_forward.1} parent=1 // pred_fallthru
      _
    // Predicated region
    $region22: #{basic_nn_forward.1} parent=1 // pred_check
      _
    $region23: #{basic_nn_forward.1} parent=1 // pred_check_branch
      %48 = sbr.rel (0) target = $region25
    $region24: #{basic_nn_forward.1} parent=1 // pred_region
      %49 = dma.done [#allocation4], 16
    $region25: #{basic_nn_forward.1} parent=1 // pred_fallthru
      _
    // Predicated region
    $region26: #{basic_nn_forward.1} parent=1 // pred_check
      _
    $region27: #{basic_nn_forward.1} parent=1 // pred_check_branch
      %51 = sbr.rel (0) target = $region29
    $region28: #{basic_nn_forward.1} parent=1 // pred_region
      %52 = dma.done [#allocation6], 16
    $region29: #{basic_nn_forward.1} parent=1 // pred_fallthru
      _
    // Predicated region
    $region30: #{basic_nn_forward.1} parent=1 // pred_check
      _
    $region31: #{basic_nn_forward.1} parent=1 // pred_check_branch
      %54 = sbr.rel (0) target = $region33
    $region32: #{basic_nn_forward.1} parent=1 // pred_region
      %55 = dma.done [#allocation6], 16
    $region33: #{basic_nn_forward.1} parent=1 // pred_fallthru
      _
    %56 = sfence
    %v57 = vld [vmem:[%s4] sm:$0xff]
    %s58 = sld [smem:[#allocation2]]
    %v59 = vstv %s58
    %v60 = vadd.f32 %v59, 0.0
    %s61 = sld [smem:[#allocation3]]
    %v62 = vstv %s61
    %v63 = vmul.f32 %v57, %v62
    %s64 = sld [smem:[#allocation5]]
    %v65 = vstv %s64
    %v66 = vadd.f32 %v63, %v65
    %v67 = vmax.f32 %v66, 0.0
    %s68 = sld [smem:[#allocation7]]
    %v69 = vstv %s68
    %v70 = vmul.f32 %v67, %v69
    %v71 = vadd.f32 %v60, %v70
    %s72 = sld [smem:[#allocation3 + $0x1]]
    %v73 = vstv %s72
    %v74 = vmul.f32 %v57, %v73
    %s75 = sld [smem:[#allocation5 + $0x1]]
    %v76 = vstv %s75
    %v77 = vadd.f32 %v74, %v76
    %v78 = vmax.f32 %v77, 0.0
    %s79 = sld [smem:[#allocation7 + $0x1]]
    %v80 = vstv %s79
    %v81 = vmul.f32 %v78, %v80
    %v82 = vadd.f32 %v71, %v81
    %s83 = sld [smem:[#allocation3 + $0x2]]
    %v84 = vstv %s83
    %v85 = vmul.f32 %v57, %v84
    %s86 = sld [smem:[#allocation5 + $0x2]]
    %v87 = vstv %s86
    %v88 = vadd.f32 %v85, %v87
    %v89 = vmax.f32 %v88, 0.0
    %s90 = sld [smem:[#allocation7 + $0x2]]
    %v91 = vstv %s90
    %v92 = vmul.f32 %v89, %v91
    %v93 = vadd.f32 %v82, %v92
    %s94 = sld [smem:[#allocation3 + $0x3]]
    %v95 = vstv %s94
    %v96 = vmul.f32 %v57, %v95
    %s97 = sld [smem:[#allocation5 + $0x3]]
    %v98 = vstv %s97
    %v99 = vadd.f32 %v96, %v98
    %v100 = vmax.f32 %v99, 0.0
    %s101 = sld [smem:[#allocation7 + $0x3]]
    %v102 = vstv %s101
    %v103 = vmul.f32 %v100, %v102
    %v104 = vadd.f32 %v93, %v103
    %s105 = sld [smem:[#allocation3 + $0x4]]
    %v106 = vstv %s105
    %v107 = vmul.f32 %v57, %v106
    %s108 = sld [smem:[#allocation5 + $0x4]]
    %v109 = vstv %s108
    %v110 = vadd.f32 %v107, %v109
    %v111 = vmax.f32 %v110, 0.0
    %s112 = sld [smem:[#allocation7 + $0x4]]
    %v113 = vstv %s112
    %v114 = vmul.f32 %v111, %v113
    %v115 = vadd.f32 %v104, %v114
    %s116 = sld [smem:[#allocation3 + $0x5]]
    %v117 = vstv %s116
    %v118 = vmul.f32 %v57, %v117
    %s119 = sld [smem:[#allocation5 + $0x5]]
    %v120 = vstv %s119
    %v121 = vadd.f32 %v118, %v120
    %v122 = vmax.f32 %v121, 0.0
    %s123 = sld [smem:[#allocation7 + $0x5]]
    %v124 = vstv %s123
    %v125 = vmul.f32 %v122, %v124
    %v126 = vadd.f32 %v115, %v125
    %s127 = sld [smem:[#allocation3 + $0x6]]
    %v128 = vstv %s127
    %v129 = vmul.f32 %v57, %v128
    %s130 = sld [smem:[#allocation5 + $0x6]]
    %v131 = vstv %s130
    %v132 = vadd.f32 %v129, %v131
    %v133 = vmax.f32 %v132, 0.0
    %s134 = sld [smem:[#allocation7 + $0x6]]
    %v135 = vstv %s134
    %v136 = vmul.f32 %v133, %v135
    %v137 = vadd.f32 %v126, %v136
    %s138 = sld [smem:[#allocation3 + $0x7]]
    %v139 = vstv %s138
    %v140 = vmul.f32 %v57, %v139
    %s141 = sld [smem:[#allocation5 + $0x7]]
    %v142 = vstv %s141
    %v143 = vadd.f32 %v140, %v142
    %v144 = vmax.f32 %v143, 0.0
    %s145 = sld [smem:[#allocation7 + $0x7]]
    %v146 = vstv %s145
    %v147 = vmul.f32 %v144, %v146
    %v148 = vadd.f32 %v137, %v147
    %s149 = sld [smem:[#allocation3 + $0x8]]
    %v150 = vstv %s149
    %v151 = vmul.f32 %v57, %v150
    %s152 = sld [smem:[#allocation5 + $0x8]]
    %v153 = vstv %s152
    %v154 = vadd.f32 %v151, %v153
    %v155 = vmax.f32 %v154, 0.0
    %s156 = sld [smem:[#allocation7 + $0x8]]
    %v157 = vstv %s156
    %v158 = vmul.f32 %v155, %v157
    %v159 = vadd.f32 %v148, %v158
    %s160 = sld [smem:[#allocation3 + $0x9]]
    %v161 = vstv %s160
    %v162 = vmul.f32 %v57, %v161
    %s163 = sld [smem:[#allocation5 + $0x9]]
    %v164 = vstv %s163
    %v165 = vadd.f32 %v162, %v164
    %v166 = vmax.f32 %v165, 0.0
    %s167 = sld [smem:[#allocation7 + $0x9]]
    %v168 = vstv %s167
    %v169 = vmul.f32 %v166, %v168
    %v170 = vadd.f32 %v159, %v169
    %171 = vst [vmem:[%s5] sm:$0xff] %v170
    // Predicated region
    $region34: #{basic_nn_forward.1} parent=1 // pred_check
      _
    $region35: #{basic_nn_forward.1} parent=1 // pred_check_branch
      %173 = sbr.rel (0) target = $region37
    $region36: #{basic_nn_forward.1} parent=1 // pred_region
      _
    $region37: #{basic_nn_forward.1} parent=1 // pred_fallthru
      _
    // Predicated region
    $region38: #{basic_nn_forward.1} parent=1 // pred_check
      _
    $region39: #{basic_nn_forward.1} parent=1 // pred_check_branch
      %175 = sbr.rel (0) target = $region41
    $region40: #{basic_nn_forward.1} parent=1 // pred_region
      _
    $region41: #{basic_nn_forward.1} parent=1 // pred_fallthru
      _
    %176 = vsyncpa [#allocation4], 1
    %177 = vsyncpa [#allocation6], 1

</llo_original>
